<compile_context>
chip_gen: v5e
topology: v5e:2x2
jax: 0.10.0
libtpu: 0.0.40
codegen_flags: <defaults>
</compile_context>

<pallas_src>
import jax
import jax.numpy as jnp
from jax.experimental import pallas as pl
from jax.experimental.pallas import tpu as pltpu


def _round_up(x, m):
    return (x + m - 1) // m * m


def _pick_tile(dim, full_limit, divisor_candidates, pad_tile):
    """Pick a block size for `dim`.

    Preference order:
      1. full-extent block (dim <= full_limit)   -> no padding, always legal
      2. a candidate that divides `dim` exactly  -> no padding
      3. pad `dim` up to a multiple of pad_tile  -> rare fallback
    Returns (tile, padded_dim).
    """
    if dim <= full_limit:
        return dim, dim
    for t in divisor_candidates:
        if dim % t == 0:
            return t, dim
    return pad_tile, _round_up(dim, pad_tile)


def _vmem_capacity_bytes():
    try:
        return int(pltpu.get_tpu_info().vmem_capacity_bytes)
    except Exception:
        return 64 * 1024 * 1024  # conservative (v7x per-TC budget)


# --------------------------------------------------------------------------
# Kernels
# --------------------------------------------------------------------------
def _linear_bias_kernel(x_ref, w_ref, b_ref, o_ref):
    # Single K step: no accumulator needed, bias-add fused into the store.
    o_ref[...] = (
        jnp.dot(x_ref[...], w_ref[...], preferred_element_type=jnp.float32)
        + b_ref[...]
    ).astype(o_ref.dtype)


def _linear_bias_acc_kernel(x_ref, w_ref, b_ref, o_ref, acc_ref):
    # x_ref : (tm, tk)  activation tile
    # w_ref : (tk, tn)  pre-transposed weight tile (in, out) layout
    # b_ref : (1,  tn)  bias tile
    # o_ref : (tm, tn)  output tile
    # acc_ref: (tm, tn) f32 accumulator scratch (lives across the K axis)
    k = pl.program_id(2)
    part = jnp.dot(x_ref[...], w_ref[...], preferred_element_type=jnp.float32)

    @pl.when(k == 0)
    def _():
        acc_ref[...] = part            # direct write: saves zero-fill + add

    @pl.when(k != 0)
    def _():
        acc_ref[...] += part

    @pl.when(k == pl.num_programs(2) - 1)
    def _():
        o_ref[...] = (acc_ref[...] + b_ref[...]).astype(o_ref.dtype)


# --------------------------------------------------------------------------
# Wrapper
# --------------------------------------------------------------------------
def prepare_params(weight, bias):
    """One-time layout prep (call at parameter-init time, NOT in the forward).

    PyTorch nn.Linear stores weight as (out, in); the kernel consumes (in, out)
    so the MXU sees a plain matmul with no per-step transpose.
    """
    return jnp.asarray(weight).T, jnp.asarray(bias).reshape(1, -1)


def classifier_forward(x, w_t, bias2d, *, force_pallas=False):
    """forward(x) = x @ W.T + b, with W.T pre-materialized as w_t (in, out)."""
    B, K = x.shape
    K2, N = w_t.shape
    assert K == K2 and bias2d.shape == (1, N)

    # Tiny problems are dominated by launch / grid-step overhead: XLA wins.
    if not force_pallas and (2 * B * N * K) < (1 << 22):
        return x @ w_t + bias2d

    # ---- generation-aware budgets -----------------------------------------
    vmem_cap = _vmem_capacity_bytes()
    big_vmem = vmem_cap >= 96 * 1024 * 1024        # v5e/v6e: 128 MiB; v7x: 64 MiB
    lane_cap = 2048 if big_vmem else 1024          # max lane-dim tile (f32)
    lane_candidates = tuple(range(lane_cap, 127, -128))
    vmem_limit = int(min(vmem_cap * 0.8, 112 * 1024 * 1024))

    # ---- tile selection -----------------------------------------------------
    # tm covers the whole batch when it fits -> the (large) weight streams from
    # HBM exactly once; tn/tk as large as the VMEM budget allows.
    tm, Mp = _pick_tile(B, 512, (512, 384, 256, 128, 64, 32, 16, 8), 256)
    tk, Kp = _pick_tile(K, lane_cap, lane_candidates, 512)
    tn, Np = _pick_tile(N, lane_cap, lane_candidates, 512)

    # Padding is a rare fallback (only when no full/divisor tile exists).
    # TODO(synk): for production, pad parameters once at init time instead.
    xp = x if (Mp == B and Kp == K) else jnp.pad(x, ((0, Mp - B), (0, Kp - K)))
    wp = w_t if (Kp == K and Np == N) else jnp.pad(w_t, ((0, Kp - K), (0, Np - N)))
    bp = bias2d if Np == N else jnp.pad(bias2d, ((0, 0), (0, Np - N)))

    gi, gj, gk = Mp // tm, Np // tn, Kp // tk

    # Real streamed bytes (including re-reads) for XLA's scheduler.
    isz = jnp.dtype(x.dtype).itemsize
    wsz = jnp.dtype(w_t.dtype).itemsize
    bsz = jnp.dtype(bias2d.dtype).itemsize
    cost = pl.CostEstimate(
        flops=2 * Mp * Np * Kp,
        transcendentals=0,
        bytes_accessed=(Mp * Kp * isz * gj       # x re-read once per j block
                        + Kp * Np * wsz * gi     # weight re-read once per i block
                        + Np * bsz * gi
                        + Mp * Np * isz),
    )

    if gk == 1:
        out = pl.pallas_call(
            _linear_bias_kernel,
            out_shape=jax.ShapeDtypeStruct((Mp, Np), x.dtype),
            grid_spec=pltpu.PrefetchScalarGridSpec(
                num_scalar_prefetch=0,
                grid=(gi, gj),
                in_specs=[
                    pl.BlockSpec((tm, tk), lambda i, j: (i, 0)),   # x
                    pl.BlockSpec((tk, tn), lambda i, j: (0, j)),   # W.T (in,out)
                    pl.BlockSpec((1, tn), lambda i, j: (0, j)),    # bias
                ],
                out_specs=pl.BlockSpec((tm, tn), lambda i, j: (i, j)),
            ),
            compiler_params=pltpu.CompilerParams(
                dimension_semantics=("parallel", "parallel"),
                vmem_limit_bytes=vmem_limit,
            ),
            cost_estimate=cost,
        )(xp, wp, bp)
    else:
        out = pl.pallas_call(
            _linear_bias_acc_kernel,
            out_shape=jax.ShapeDtypeStruct((Mp, Np), x.dtype),
            grid_spec=pltpu.PrefetchScalarGridSpec(
                num_scalar_prefetch=0,
                grid=(gi, gj, gk),
                in_specs=[
                    pl.BlockSpec((tm, tk), lambda i, j, k: (i, k)),  # x
                    pl.BlockSpec((tk, tn), lambda i, j, k: (k, j)),  # W.T (in,out)
                    pl.BlockSpec((1, tn), lambda i, j, k: (0, j)),   # bias
                ],
                out_specs=pl.BlockSpec((tm, tn), lambda i, j, k: (i, j)),
                scratch_shapes=[pltpu.VMEM((tm, tn), jnp.float32)],
            ),
            compiler_params=pltpu.CompilerParams(
                dimension_semantics=("parallel", "parallel", "arbitrary"),
                vmem_limit_bytes=vmem_limit,
            ),
            cost_estimate=cost,
        )(xp, wp, bp)

    if Mp != B or Np != N:
        out = out[:B, :N]
    return out


if __name__ == "__main__":
    # Small shapes implied by nn.Linear(in_size, out_size).
    batch, in_size, out_size = 8, 32, 16

    key = jax.random.PRNGKey(0)
    kx, kw, kb = jax.random.split(key, 3)

    # Deterministic parameter init (mimics torch.nn.Linear uniform init range).
    bound = 1.0 / (in_size ** 0.5)
    x = jax.random.normal(kx, (batch, in_size), dtype=jnp.float32)
    weight = jax.random.uniform(kw, (out_size, in_size), jnp.float32, -bound, bound)
    bias = jax.random.uniform(kb, (out_size,), jnp.float32, -bound, bound)

    # One-time layout prep (outside the hot forward path).
    w_t, b2d = prepare_params(weight, bias)

    # force_pallas=True so the Pallas path is exercised even at these tiny
    # shapes (default heuristic falls back to XLA below ~4 MFLOP).
    out = classifier_forward(x, w_t, b2d, force_pallas=True)
    jax.block_until_ready(out)

    # Correctness check against plain-JAX reference of the PyTorch forward.
    ref = x @ weight.T + bias
    assert out.shape == (batch, out_size)
    assert jnp.allclose(out, ref, atol=1e-5, rtol=1e-5)

    print("KERNEL_OK")
</pallas_src>

<mosaic_0001>
module attributes {stable_mosaic.version = 11 : i64} {
  func.func @_linear_bias_kernel(%arg0: i32, %arg1: i32, %arg2: memref<8x32xf32, #tpu.memory_space<vmem>>, %arg3: memref<32x16xf32, #tpu.memory_space<vmem>>, %arg4: memref<1x16xf32, #tpu.memory_space<vmem>>, %arg5: memref<8x16xf32, #tpu.memory_space<vmem>>) attributes {dimension_semantics = [#tpu.dimension_semantics<parallel>, #tpu.dimension_semantics<parallel>], iteration_bounds = array<i64: 1, 1>, scalar_prefetch = 0 : i64, scratch_operands = 0 : i64, tpu.core_type = #tpu.core_type<tc>, window_params = [{transform_indices = @transform_0, window_bounds = array<i64: 8, 32>}, {transform_indices = @transform_1, window_bounds = array<i64: 32, 16>}, {transform_indices = @transform_2, window_bounds = array<i64: 1, 16>}, {transform_indices = @transform_3, window_bounds = array<i64: 8, 16>}]} {
    %c0 = arith.constant 0 : index
    %c0_0 = arith.constant 0 : index
    %0 = vector.load %arg2[%c0, %c0_0] : memref<8x32xf32, #tpu.memory_space<vmem>>, vector<8x32xf32>
    %c0_1 = arith.constant 0 : index
    %c0_2 = arith.constant 0 : index
    %1 = vector.load %arg3[%c0_1, %c0_2] : memref<32x16xf32, #tpu.memory_space<vmem>>, vector<32x16xf32>
    %cst = arith.constant dense<0.000000e+00> : vector<8x16xf32>
    %2 = tpu.matmul %0, %1, %cst {dimension_numbers = #tpu.dot_dimension_numbers<[1], [0], [0], [1], [0, 0, 1, 1], [], []>} : vector<8x32xf32>, vector<32x16xf32>, vector<8x16xf32> -> vector<8x16xf32>
    %c0_3 = arith.constant 0 : index
    %c0_4 = arith.constant 0 : index
    %3 = vector.load %arg4[%c0_3, %c0_4] : memref<1x16xf32, #tpu.memory_space<vmem>>, vector<1x16xf32>
    %4 = vector.broadcast %3 : vector<1x16xf32> to vector<8x16xf32>
    %5 = arith.addf %2, %4 : vector<8x16xf32>
    %c0_5 = arith.constant 0 : index
    %c0_6 = arith.constant 0 : index
    %6 = vector.load %arg5[%c0_5, %c0_6] : memref<8x16xf32, #tpu.memory_space<vmem>>, vector<8x16xf32>
    tpu.vector_store %arg5[%c0_5, %c0_6], %5 {strides = array<i32>} : memref<8x16xf32, #tpu.memory_space<vmem>>, vector<8x16xf32>,
    return
  }
  func.func @transform_0(%arg0: i32, %arg1: i32) -> (i32, i32) {
    %c0_i32 = arith.constant 0 : i32
    %c0_i32_0 = arith.constant 0 : i32
    return %arg0, %c0_i32 : i32, i32
  }
  func.func @transform_1(%arg0: i32, %arg1: i32) -> (i32, i32) {
    %c0_i32 = arith.constant 0 : i32
    %c0_i32_0 = arith.constant 0 : i32
    return %c0_i32, %arg1 : i32, i32
  }
  func.func @transform_2(%arg0: i32, %arg1: i32) -> (i32, i32) {
    %c0_i32 = arith.constant 0 : i32
    %c0_i32_0 = arith.constant 0 : i32
    return %c0_i32, %arg1 : i32, i32
  }
  func.func @transform_3(%arg0: i32, %arg1: i32) -> (i32, i32) {
    %c0_i32 = arith.constant 0 : i32
    return %arg0, %arg1 : i32, i32
  }
}

</mosaic_0001>

<llo_original>
// kernel: tpu_custom_call.1
$region0: #{tpu_custom_call.1}
  #allocation0 [shape = 'u32[]', space=smem, size = 0x4, offset = 0x4, fixed_abs, tag = 'smem constant byte address 0x4 - core index']
  #allocation1 [shape = 'u32[72,128]{1,0:T(1,128)}', space=vmem, size = 0x9000, scoped, tag = 'internal scratch']
  %s0 = inlined_call_operand.vmem [shape: f32[8,32], index: 0, kind: input, shape index: {}]
  %s1 = inlined_call_operand.vmem [shape: f32[32,16], index: 1, kind: input, shape index: {}]
  %s2 = inlined_call_operand.vmem [shape: f32[1,16], index: 2, kind: input, shape index: {}]
  %s3 = inlined_call_operand.hbm [shape: f32[8,16], index: 3, kind: output, shape index: {}]
  %s4 = sld [smem:[#allocation0]]
  $region22: #{tpu_custom_call.1} parent=0
    _
  %s6 = ssub.s32 1, %s4
  %s7 = scalar_select 0, %s6, %s4
  $region1: #{tpu_custom_call.1} parent=0
    #allocation2 [shape = 'u8[4096]{0}', space=vmem, size = 0x1000, scoped, tag = 'output window, operand 0, single buffered']
    #allocation3 [shape = 's32[1]{0}', space=sflag, size = 0x4, scoped, tag = 'scoped memory for tpu_custom_call.1']
    %8 = vsyncpa [#allocation3], 0
    // Predicated region
    $region2: #{tpu_custom_call.1} parent=1 // pred_check
      _
    $region3: #{tpu_custom_call.1} parent=1 // pred_check_branch
      %10 = sbr.rel (0) target = $region5
    $region4: #{tpu_custom_call.1} parent=1 // pred_region
      _
    $region5: #{tpu_custom_call.1} parent=1 // pred_fallthru
      _
    // Predicated region
    $region6: #{tpu_custom_call.1} parent=1 // pred_check
      _
    $region7: #{tpu_custom_call.1} parent=1 // pred_check_branch
      %12 = sbr.rel (0) target = $region9
    $region8: #{tpu_custom_call.1} parent=1 // pred_region
      _
    $region9: #{tpu_custom_call.1} parent=1 // pred_fallthru
      _
    // Predicated region
    $region10: #{tpu_custom_call.1} parent=1 // pred_check
      _
    $region11: #{tpu_custom_call.1} parent=1 // pred_check_branch
      %14 = sbr.rel (0) target = $region13
    $region12: #{tpu_custom_call.1} parent=1 // pred_region
      _
    $region13: #{tpu_custom_call.1} parent=1 // pred_fallthru
      _
    %v15 = vld [vmem:[%s0] sm:$0xff]
    %v16 = vld [vmem:[%s1] sm:$0xff]
    %v17 = vld [vmem:[%s1 + $0x8] sm:$0xff]
    %v18 = vld [vmem:[%s1 + $0x10] sm:$0xff]
    %v19 = vld [vmem:[%s1 + $0x18] sm:$0xff]
    %v20 = vld [vmem:[%s2] sm:$0x1]
    %v22 = vperm.slane %v20, 0
    %vm24 = vcmask 261120
    %v26 = vsel %vm24, %v15, 0
    %28 = vmatpush.msra.mxu0 0.0
    %29 = vmatpush.msra.mxu0 0.0
    %30 = vmatpush.msra.mxu0 0.0
    %31 = vmatpush.msra.mxu0 0.0
    %32 = vmatpush.msra.mxu0 0.0
    %33 = vmatpush.msra.mxu0 0.0
    %34 = vmatpush.msra.mxu0 0.0
    %35 = vmatpush.msra.mxu0 0.0
    %36 = vmatpush.msra.mxu0 0.0
    %37 = vmatpush.msra.mxu0 0.0
    %38 = vmatpush.msra.mxu0 0.0
    %39 = vmatpush.msra.mxu0 0.0
    %40 = vmatpush.msra.mxu0 %v19
    %41 = vmatpush.msra.mxu0 %v18
    %42 = vmatpush.msra.mxu0 %v17
    %43 = vmatpush.msra.mxu0 %v16
    %44 = vmatmul.f32.gmra.mxu0 %v26
    %v45 = vpop.f32.mrf.mxu0
    %v46 = vadd.f32 %v22, %v45
    %47 = vdwg.mxu0
    %vm48 = vcmask 130048
    %49 = vst.msk [vmem:[#allocation2] sm:$0xff] %vm48, %v46
    // Predicated region
    $region14: #{tpu_custom_call.1} parent=1 // pred_check
      _
    $region15: #{tpu_custom_call.1} parent=1 // pred_check_branch
      %51 = sbr.rel (0) target = $region17
    $region16: #{tpu_custom_call.1} parent=1 // pred_region
      %53 = vsyncadd [#allocation3], 0
      %s55 = sshll.u32 [#allocation2], 4
      %s56 = int_to_ptr.vmem [resolvable:$true] %s55
      %s57 = sshll.u32 %s3, 4
      %s58 = int_to_ptr.hbm [resolvable:$true] %s57
      %60 = dma.vmem_to_hbm [thread:$0]  %s56, 128, %s58, [#allocation3]
    $region17: #{tpu_custom_call.1} parent=1 // pred_fallthru
      _
    // Predicated region
    $region18: #{tpu_custom_call.1} parent=1 // pred_check
      _
    $region19: #{tpu_custom_call.1} parent=1 // pred_check_branch
      %62 = sbr.rel (0) target = $region21
    $region20: #{tpu_custom_call.1} parent=1 // pred_region
      %64 = dma.done [#allocation3], 128
    $region21: #{tpu_custom_call.1} parent=1 // pred_fallthru
      _
    %65 = vsyncpa [#allocation3], 1

</llo_original>
